<compile_context>
chip_gen: v7x
topology: tpu7x:2x2x1
jax: 0.10.0
libtpu: 0.0.40
codegen_flags: <defaults>
</compile_context>

<pallas_src>
import math
import functools

import jax
import jax.numpy as jnp
from jax import lax
from jax.experimental import pallas as pl
from jax.experimental.pallas import tpu as pltpu

EPS = 1e-12


# ------------------------------ in-kernel math ------------------------------ #

def _layernorm(x, gamma, beta):
    mean = jnp.mean(x, axis=-1, keepdims=True)
    var = jnp.mean((x - mean) ** 2, axis=-1, keepdims=True)   # unbiased=False
    return gamma * ((x - mean) * lax.rsqrt(var + EPS)) + beta


def _attn(x_q, k, v, bias, wq_ref, bq_ref, wc_ref, bc_ref, n_head):
    """Attention for one q-tile with precomputed K/V.

    x_q:  (Lq, H) f32   query rows (also the residual input)
    k, v: (Lk, H) bf16  precomputed key/value projections (full sequence)
    bias: (Lq, Lk) f32  additive mask bias (0 keep / -1e4 masked)
    """
    Lq, H = x_q.shape
    Lk = k.shape[0]
    d = H // n_head
    scale = 1.0 / math.sqrt(d)

    # Q projection only — K/V were hoisted out of the per-tile loop.
    q = jnp.dot(x_q.astype(jnp.bfloat16), wq_ref[...],
                preferred_element_type=jnp.float32) + bq_ref[...]
    # Fold the 1/sqrt(d) scale into q (small tensor) instead of the score.
    q = (q * scale).astype(jnp.bfloat16).reshape(Lq, n_head, d)
    k = k.reshape(Lk, n_head, d)
    v = v.reshape(Lk, n_head, d)

    # Batched-head scores on the untransposed (L, h, d) layout; f32 accumulate.
    s = jnp.einsum('qhd,khd->hqk', q, k, preferred_element_type=jnp.float32)
    # Mask bias + stable softmax, reusing the same buffer (keeps one live tensor).
    s = s + bias[None, :, :]
    s = s - jnp.max(s, axis=-1, keepdims=True)
    p = jnp.exp(s)
    p = p * (1.0 / jnp.sum(p, axis=-1, keepdims=True))    # exact reciprocal

    ctx = jnp.einsum('hqk,khd->qhd', p.astype(jnp.bfloat16), v,
                     preferred_element_type=jnp.float32).reshape(Lq, H)
    return jnp.dot(ctx.astype(jnp.bfloat16), wc_ref[...],
                   preferred_element_type=jnp.float32) + bc_ref[...]


# --------------------------------- kernels ----------------------------------- #

def _kv_project_kernel(x_ref, wk_ref, bk_ref, wv_ref, bv_ref, k_ref, v_ref):
    """K/V projection for one row tile: k = x@wk+bk, v = x@wv+bv (bf16 out)."""
    x = x_ref[0].astype(jnp.bfloat16)
    k = jnp.dot(x, wk_ref[...], preferred_element_type=jnp.float32) + bk_ref[...]
    v = jnp.dot(x, wv_ref[...], preferred_element_type=jnp.float32) + bv_ref[...]
    k_ref[0] = k.astype(k_ref.dtype)
    v_ref[0] = v.astype(v_ref.dtype)


def _decoder_layer_kernel(n_head, dq_ref, ks_ref, vs_ref, kc_ref, vc_ref,
                          tmask_ref, smask_ref, *refs):
    out_ref = refs[-1]
    (wq1, bq1, wc1, bc1, g1, be1,
     wq2, bq2, wc2, bc2, g2, be2,
     wf1, bf1, wf2, bf2, g3, be3) = refs[:-1]

    dec_q = dq_ref[0]                          # (TQ, H) f32  query rows + residual
    # Additive mask biases (nonzero = keep), computed once per tile in f32.
    tbias = jnp.where(tmask_ref[0] == 0, -10000.0, 0.0).astype(jnp.float32)
    sbias = jnp.where(smask_ref[0] == 0, -10000.0, 0.0).astype(jnp.float32)

    # 1) masked self-attention + residual + LN (dropout = identity, eval mode)
    x = _attn(dec_q, ks_ref[0], vs_ref[0], tbias, wq1, bq1, wc1, bc1, n_head)
    x = _layernorm(x + dec_q, g1[...], be1[...])

    # 2) encoder-decoder attention + residual + LN
    res = x
    x = _attn(x, kc_ref[0], vc_ref[0], sbias, wq2, bq2, wc2, bc2, n_head)
    x = _layernorm(x + res, g2[...], be2[...])

    # 3) position-wise FFN + residual + LN (wf1/wf2 only read here)
    res = x
    h = jnp.maximum(
        jnp.dot(x.astype(jnp.bfloat16), wf1[...],
                preferred_element_type=jnp.float32) + bf1[...], 0.0)
    x = jnp.dot(h.astype(jnp.bfloat16), wf2[...],
                preferred_element_type=jnp.float32) + bf2[...]
    x = _layernorm(x + res, g3[...], be3[...])

    out_ref[0] = x.astype(out_ref.dtype)


# --------------------------------- wrappers ----------------------------------- #

def _round_up(n, m):
    return ((n + m - 1) // m) * m


def _proj_row_tile(L):
    for t in (512, 256, 128, 64, 32, 16, 8):
        if L % t == 0:
            return t
    return L


def _project_kv(x, wk, bk, wv, bv):
    """Hoisted K/V projection: computed once per sequence (not once per q-tile)."""
    B, L, H = x.shape
    t = _proj_row_tile(L)
    row = pl.BlockSpec((1, t, H), lambda b, i: (b, i, 0))
    const = lambda w: pl.BlockSpec(w.shape, lambda b, i: (0, 0))
    return pl.pallas_call(
        _kv_project_kernel,
        out_shape=(jax.ShapeDtypeStruct((B, L, H), jnp.bfloat16),
                   jax.ShapeDtypeStruct((B, L, H), jnp.bfloat16)),
        grid_spec=pltpu.PrefetchScalarGridSpec(
            num_scalar_prefetch=0,
            grid=(B, L // t),
            in_specs=[row, const(wk), const(bk), const(wv), const(bv)],
            out_specs=(row, row)),
        compiler_params=pltpu.CompilerParams(
            dimension_semantics=("parallel", "parallel")),
    )(x, wk, bk, wv, bv)


def _vmem_limit_bytes(Lp, Ls, H, F, n_head, q_tile, weights):
    # Resident weights (single-buffered) + per-step IO blocks + large transients,
    # with 2x headroom, clamped to the v7x per-TC budget (safe on v5e/v6e too).
    weight_bytes = sum(int(w.size) * w.dtype.itemsize for w in weights)
    block_bytes = (2 * q_tile * H * 4                 # dec tile (double-buffered)
                   + 2 * q_tile * H * 4               # output tile
                   + 2 * q_tile * (Lp + Ls) * 2       # mask tiles (bf16)
                   + (Lp + Ls) * H * 2 * 2)           # K/V self + cross (bf16)
    scratch = (2 * n_head * q_tile * max(Lp, Ls) * 4  # score + probs
               + q_tile * F * 4                       # FFN hidden
               + 6 * q_tile * H * 4)                  # q/ctx/residual temporaries
    est = weight_bytes + block_bytes + scratch
    return int(min(max(2 * est, 8 * 2 ** 20), 64 * 2 ** 20))


def _decoder_layer_call(dec_p, k_self, v_self, k_cross, v_cross, trg_p, src_p,
                        weights, n_head, q_tile, single_buffer):
    B, Lp, H = dec_p.shape
    Ls = k_cross.shape[1]
    nq = Lp // q_tile
    F = weights[12].shape[1]                  # wf1: (H, F)

    def const_spec(w):
        # Constant block index across the whole grid -> fetched once.
        if single_buffer:
            return pl.BlockSpec(w.shape, lambda b, qi: (0, 0),
                                pipeline_mode=pl.Buffered(1))
        return pl.BlockSpec(w.shape, lambda b, qi: (0, 0))

    def full_seq(arr):
        # Block index only changes on the batch axis; single buffer saves VMEM.
        rows = arr.shape[1]
        if single_buffer:
            return pl.BlockSpec((1, rows, H), lambda b, qi: (b, 0, 0),
                                pipeline_mode=pl.Buffered(1))
        return pl.BlockSpec((1, rows, H), lambda b, qi: (b, 0, 0))

    def row(last):
        return pl.BlockSpec((1, q_tile, last), lambda b, qi: (b, qi, 0))

    in_specs = ([row(H),                       # dec query rows (+ residual)
                 full_seq(k_self), full_seq(v_self),
                 full_seq(k_cross), full_seq(v_cross),
                 row(Lp),                      # trg mask rows
                 row(Ls)]                      # src mask rows
                + [const_spec(w) for w in weights])

    kernel = functools.partial(_decoder_layer_kernel, n_head)
    return pl.pallas_call(
        kernel,
        out_shape=jax.ShapeDtypeStruct((B, Lp, H), jnp.float32),
        grid_spec=pltpu.PrefetchScalarGridSpec(
            num_scalar_prefetch=0,
            grid=(B, nq),
            in_specs=in_specs,
            out_specs=pl.BlockSpec((1, q_tile, H), lambda b, qi: (b, qi, 0))),
        compiler_params=pltpu.CompilerParams(
            dimension_semantics=("parallel", "parallel"),
            vmem_limit_bytes=_vmem_limit_bytes(Lp, Ls, H, F, n_head, q_tile,
                                               weights)),
    )(dec_p, k_self, v_self, k_cross, v_cross, trg_p, src_p, *weights)


def decoder_layer(dec, enc, trg_mask, src_mask, weights, n_head, q_tile=256):
    B, L, H = dec.shape
    _, Ls, _ = enc.shape
    (wq1, bq1, wk1, bk1, wv1, bv1, wc1, bc1, g1, be1,
     wq2, bq2, wk2, bk2, wv2, bv2, wc2, bc2, g2, be2,
     wf1, bf1, wf2, bf2, g3, be3) = weights

    bf = jnp.bfloat16
    # MXU operand weights in bf16 (halves HBM traffic + VMEM; f32 accumulate).
    wq1b, wk1b, wv1b, wc1b = (w.astype(bf) for w in (wq1, wk1, wv1, wc1))
    wq2b, wk2b, wv2b, wc2b = (w.astype(bf) for w in (wq2, wk2, wv2, wc2))
    wf1b, wf2b = wf1.astype(bf), wf2.astype(bf)

    # Pad the decoder sequence so q-tiles divide it evenly; padded keys are
    # masked out (zeros in the padded trg_mask) and padded query rows discarded.
    q_tile = min(q_tile, _round_up(L, 8))
    Lp = _round_up(L, q_tile)
    pad = Lp - L
    dec_p = jnp.pad(dec, ((0, 0), (0, pad), (0, 0)))
    trg_p = jnp.pad(trg_mask, ((0, 0), (0, pad), (0, pad))).astype(bf)
    src_p = jnp.pad(src_mask, ((0, 0), (0, pad), (0, 0))).astype(bf)

    # Hoisted K/V projections (once per sequence, not once per q-tile).
    k_self, v_self = _project_kv(dec_p, wk1b, bk1, wv1b, bv1)
    k_cross, v_cross = _project_kv(enc, wk2b, bk2, wv2b, bv2)

    main_weights = (wq1b, bq1, wc1b, bc1, g1, be1,
                    wq2b, bq2, wc2b, bc2, g2, be2,
                    wf1b, bf1, wf2b, bf2, g3, be3)

    try:
        out_p = _decoder_layer_call(dec_p, k_self, v_self, k_cross, v_cross,
                                    trg_p, src_p, main_weights, n_head, q_tile,
                                    single_buffer=True)
    except Exception:
        # TODO(synk): pl.Buffered(1) single-buffering rejected on this jax
        # version — fall back to default double-buffered blocks (correct,
        # just uses more VMEM).
        out_p = _decoder_layer_call(dec_p, k_self, v_self, k_cross, v_cross,
                                    trg_p, src_p, main_weights, n_head, q_tile,
                                    single_buffer=False)
    return out_p[:, :L, :]


# ------------------------------ parameter init ------------------------------ #

def init_params(key, hidden_size, ffn_hidden):
    # 10 Linear layers (4 self-attn, 4 enc-dec attn, 2 FFN) x 2 keys (w, b).
    keys = jax.random.split(key, 20)
    ki = iter(keys)

    def lin(in_dim, out_dim):
        w = 0.05 * jax.random.normal(next(ki), (in_dim, out_dim), jnp.float32)
        b = 0.05 * jax.random.normal(next(ki), (1, out_dim), jnp.float32)
        return w, b

    params = []
    for _ in range(4):                                    # self-attn q,k,v,concat
        params.extend(lin(hidden_size, hidden_size))
    params.extend([jnp.ones((1, hidden_size), jnp.float32),   # norm1
                   jnp.zeros((1, hidden_size), jnp.float32)])
    for _ in range(4):                                    # enc-dec q,k,v,concat
        params.extend(lin(hidden_size, hidden_size))
    params.extend([jnp.ones((1, hidden_size), jnp.float32),   # norm2
                   jnp.zeros((1, hidden_size), jnp.float32)])
    params.extend(lin(hidden_size, ffn_hidden))           # ffn linear1
    params.extend(lin(ffn_hidden, hidden_size))           # ffn linear2
    params.extend([jnp.ones((1, hidden_size), jnp.float32),   # norm3
                   jnp.zeros((1, hidden_size), jnp.float32)])
    return params


# --------------------------- plain-JAX reference ---------------------------- #

def _ref_layernorm(x, g, b):
    mean = jnp.mean(x, axis=-1, keepdims=True)
    var = jnp.mean((x - mean) ** 2, axis=-1, keepdims=True)
    return g * (x - mean) / jnp.sqrt(var + EPS) + b


def _ref_mha(xq, xkv, mask, wq, bq, wk, bk, wv, bv, wc, bc, n_head):
    B, Lq, H = xq.shape
    Lk = xkv.shape[1]
    d = H // n_head
    q = (xq @ wq + bq).reshape(B, Lq, n_head, d).transpose(0, 2, 1, 3)
    k = (xkv @ wk + bk).reshape(B, Lk, n_head, d).transpose(0, 2, 1, 3)
    v = (xkv @ wv + bv).reshape(B, Lk, n_head, d).transpose(0, 2, 1, 3)
    score = jnp.einsum('bhqd,bhkd->bhqk', q, k) / math.sqrt(d)
    score = jnp.where(mask[:, None, :, :] == 0, -10000.0, score)
    p = jax.nn.softmax(score, axis=-1)
    out = jnp.einsum('bhqk,bhkd->bhqd', p, v).transpose(0, 2, 1, 3).reshape(B, Lq, H)
    return out @ wc + bc


def reference(dec, enc, tm, sm, w, n_head):
    (wq1, bq1, wk1, bk1, wv1, bv1, wc1, bc1, g1, be1,
     wq2, bq2, wk2, bk2, wv2, bv2, wc2, bc2, g2, be2,
     wf1, bf1, wf2, bf2, g3, be3) = w

    x = _ref_mha(dec, dec, tm, wq1, bq1, wk1, bk1, wv1, bv1, wc1, bc1, n_head)
    x = _ref_layernorm(x + dec, g1, be1)
    res = x
    x = _ref_mha(x, enc, sm, wq2, bq2, wk2, bk2, wv2, bv2, wc2, bc2, n_head)
    x = _ref_layernorm(x + res, g2, be2)
    res = x
    h = jnp.maximum(x @ wf1 + bf1, 0.0)
    x = h @ wf2 + bf2
    return _ref_layernorm(x + res, g3, be3)


# ----------------------------------- main ------------------------------------ #

if __name__ == "__main__":
    B, L, Ls, H, F, N_HEAD = 2, 8, 8, 32, 64, 4

    key = jax.random.PRNGKey(0)
    k_dec, k_enc, k_par = jax.random.split(key, 3)

    dec = jax.random.normal(k_dec, (B, L, H), jnp.float32)
    enc = jax.random.normal(k_enc, (B, Ls, H), jnp.float32)

    # causal target mask (1 = keep), full source mask
    trg_mask = jnp.broadcast_to(jnp.tril(jnp.ones((L, L), jnp.float32)), (B, L, L))
    src_mask = jnp.ones((B, L, Ls), jnp.float32)

    weights = init_params(k_par, H, F)

    out = decoder_layer(dec, enc, trg_mask, src_mask, weights, N_HEAD)
    out = jax.block_until_ready(out)

    ref = reference(dec, enc, trg_mask, src_mask, weights, N_HEAD)
    assert out.shape == (B, L, H)
    # tolerance covers bf16 MXU operands (reference is full f32)
    assert jnp.allclose(out, ref, atol=5e-2, rtol=5e-2), "mismatch vs JAX reference"

    print("KERNEL_OK")
</pallas_src>

<mosaic_0001>
module attributes {stable_mosaic.version = 11 : i64} {
  func.func @_kv_project_kernel(%arg0: i32, %arg1: i32, %arg2: memref<1x8x32xf32, #tpu.memory_space<vmem>>, %arg3: memref<32x32xbf16, #tpu.memory_space<vmem>>, %arg4: memref<1x32xf32, #tpu.memory_space<vmem>>, %arg5: memref<32x32xbf16, #tpu.memory_space<vmem>>, %arg6: memref<1x32xf32, #tpu.memory_space<vmem>>, %arg7: memref<1x8x32xbf16, #tpu.memory_space<vmem>>, %arg8: memref<1x8x32xbf16, #tpu.memory_space<vmem>>) attributes {dimension_semantics = [#tpu.dimension_semantics<parallel>, #tpu.dimension_semantics<parallel>], iteration_bounds = array<i64: 2, 1>, scalar_prefetch = 0 : i64, scratch_operands = 0 : i64, tpu.core_type = #tpu.core_type<tc>, window_params = [{transform_indices = @transform_0, window_bounds = array<i64: 1, 8, 32>}, {pipeline_mode = #tpu.pipeline_mode<synchronous>, transform_indices = @transform_1, window_bounds = array<i64: 32, 32>}, {pipeline_mode = #tpu.pipeline_mode<synchronous>, transform_indices = @transform_2, window_bounds = array<i64: 1, 32>}, {pipeline_mode = #tpu.pipeline_mode<synchronous>, transform_indices = @transform_3, window_bounds = array<i64: 32, 32>}, {pipeline_mode = #tpu.pipeline_mode<synchronous>, transform_indices = @transform_4, window_bounds = array<i64: 1, 32>}, {transform_indices = @transform_5, window_bounds = array<i64: 1, 8, 32>}, {transform_indices = @transform_6, window_bounds = array<i64: 1, 8, 32>}]} {
    %c0 = arith.constant 0 : index
    %c0_0 = arith.constant 0 : index
    %c0_1 = arith.constant 0 : index
    %0 = vector.load %arg2[%c0, %c0_0, %c0_1] : memref<1x8x32xf32, #tpu.memory_space<vmem>>, vector<1x8x32xf32>
    %1 = vector.shape_cast %0 : vector<1x8x32xf32> to vector<8x32xf32>
    %2 = arith.truncf %1 : vector<8x32xf32> to vector<8x32xbf16>
    %c0_2 = arith.constant 0 : index
    %c0_3 = arith.constant 0 : index
    %3 = vector.load %arg3[%c0_2, %c0_3] : memref<32x32xbf16, #tpu.memory_space<vmem>>, vector<32x32xbf16>
    %cst = arith.constant dense<0.000000e+00> : vector<8x32xf32>
    %4 = tpu.matmul %2, %3, %cst {dimension_numbers = #tpu.dot_dimension_numbers<[1], [0], [0], [1], [0, 0, 1, 1], [], []>} : vector<8x32xbf16>, vector<32x32xbf16>, vector<8x32xf32> -> vector<8x32xf32>
    %c0_4 = arith.constant 0 : index
    %c0_5 = arith.constant 0 : index
    %5 = vector.load %arg4[%c0_4, %c0_5] : memref<1x32xf32, #tpu.memory_space<vmem>>, vector<1x32xf32>
    %6 = vector.broadcast %5 : vector<1x32xf32> to vector<8x32xf32>
    %7 = arith.addf %4, %6 : vector<8x32xf32>
    %c0_6 = arith.constant 0 : index
    %c0_7 = arith.constant 0 : index
    %8 = vector.load %arg5[%c0_6, %c0_7] : memref<32x32xbf16, #tpu.memory_space<vmem>>, vector<32x32xbf16>
    %cst_8 = arith.constant dense<0.000000e+00> : vector<8x32xf32>
    %9 = tpu.matmul %2, %8, %cst_8 {dimension_numbers = #tpu.dot_dimension_numbers<[1], [0], [0], [1], [0, 0, 1, 1], [], []>} : vector<8x32xbf16>, vector<32x32xbf16>, vector<8x32xf32> -> vector<8x32xf32>
    %c0_9 = arith.constant 0 : index
    %c0_10 = arith.constant 0 : index
    %10 = vector.load %arg6[%c0_9, %c0_10] : memref<1x32xf32, #tpu.memory_space<vmem>>, vector<1x32xf32>
    %11 = vector.broadcast %10 : vector<1x32xf32> to vector<8x32xf32>
    %12 = arith.addf %9, %11 : vector<8x32xf32>
    %13 = arith.truncf %7 : vector<8x32xf32> to vector<8x32xbf16>
    %c0_11 = arith.constant 0 : index
    %c0_12 = arith.constant 0 : index
    %c0_13 = arith.constant 0 : index
    %14 = vector.load %arg7[%c0_11, %c0_12, %c0_13] : memref<1x8x32xbf16, #tpu.memory_space<vmem>>, vector<1x8x32xbf16>
    %15 = vector.shape_cast %14 : vector<1x8x32xbf16> to vector<8x32xbf16>
    %16 = vector.shape_cast %13 : vector<8x32xbf16> to vector<1x8x32xbf16>
    tpu.vector_store %arg7[%c0_11, %c0_12, %c0_13], %16 {strides = array<i32>} : memref<1x8x32xbf16, #tpu.memory_space<vmem>>, vector<1x8x32xbf16>,
    %17 = arith.truncf %12 : vector<8x32xf32> to vector<8x32xbf16>
    %c0_14 = arith.constant 0 : index
    %c0_15 = arith.constant 0 : index
    %c0_16 = arith.constant 0 : index
    %18 = vector.load %arg8[%c0_14, %c0_15, %c0_16] : memref<1x8x32xbf16, #tpu.memory_space<vmem>>, vector<1x8x32xbf16>
    %19 = vector.shape_cast %18 : vector<1x8x32xbf16> to vector<8x32xbf16>
    %20 = vector.shape_cast %17 : vector<8x32xbf16> to vector<1x8x32xbf16>
    tpu.vector_store %arg8[%c0_14, %c0_15, %c0_16], %20 {strides = array<i32>} : memref<1x8x32xbf16, #tpu.memory_space<vmem>>, vector<1x8x32xbf16>,
    return
  }
  func.func @transform_0(%arg0: i32, %arg1: i32) -> (i32, i32, i32) {
    %c0_i32 = arith.constant 0 : i32
    %c0_i32_0 = arith.constant 0 : i32
    return %arg0, %arg1, %c0_i32 : i32, i32, i32
  }
  func.func @transform_1(%arg0: i32, %arg1: i32) -> (i32, i32) {
    %c0_i32 = arith.constant 0 : i32
    %c0_i32_0 = arith.constant 0 : i32
    %c0_i32_1 = arith.constant 0 : i32
    return %c0_i32, %c0_i32_0 : i32, i32
  }
  func.func @transform_2(%arg0: i32, %arg1: i32) -> (i32, i32) {
    %c0_i32 = arith.constant 0 : i32
    %c0_i32_0 = arith.constant 0 : i32
    %c0_i32_1 = arith.constant 0 : i32
    return %c0_i32, %c0_i32_0 : i32, i32
  }
  func.func @transform_3(%arg0: i32, %arg1: i32) -> (i32, i32) {
    %c0_i32 = arith.constant 0 : i32
    %c0_i32_0 = arith.constant 0 : i32
    %c0_i32_1 = arith.constant 0 : i32
    return %c0_i32, %c0_i32_0 : i32, i32
  }
  func.func @transform_4(%arg0: i32, %arg1: i32) -> (i32, i32) {
    %c0_i32 = arith.constant 0 : i32
    %c0_i32_0 = arith.constant 0 : i32
    %c0_i32_1 = arith.constant 0 : i32
    return %c0_i32, %c0_i32_0 : i32, i32
  }
  func.func @transform_5(%arg0: i32, %arg1: i32) -> (i32, i32, i32) {
    %c0_i32 = arith.constant 0 : i32
    %c0_i32_0 = arith.constant 0 : i32
    return %arg0, %arg1, %c0_i32 : i32, i32, i32
  }
  func.func @transform_6(%arg0: i32, %arg1: i32) -> (i32, i32, i32) {
    %c0_i32 = arith.constant 0 : i32
    %c0_i32_0 = arith.constant 0 : i32
    return %arg0, %arg1, %c0_i32 : i32, i32, i32
  }
}

</mosaic_0001>

<llo_original>
// kernel: tpu_custom_call.1
$region0: #{tpu_custom_call.1}
  #allocation0 [shape = 'u32[]', space=smem, size = 0x4, offset = 0x4, fixed_abs, tag = 'smem constant byte address 0x4 - core index']
  #allocation1 [shape = 'u32[144,128]{1,0:T(1,128)}', space=vmem, size = 0x12000, scoped, tag = 'internal scratch']
  %s0 = inlined_call_operand.hbm [shape: f32[2,8,32], index: 0, kind: input, shape index: {}]
  %s1 = inlined_call_operand.hbm [shape: bf16[32,32], index: 1, kind: input, shape index: {}]
  %s2 = inlined_call_operand.vmem [shape: f32[1,32], index: 2, kind: input, shape index: {}]
  %s3 = inlined_call_operand.hbm [shape: bf16[32,32], index: 3, kind: input, shape index: {}]
  %s4 = inlined_call_operand.vmem [shape: f32[1,32], index: 4, kind: input, shape index: {}]
  %s5 = inlined_call_operand.hbm [shape: bf16[2,8,32], index: 5, kind: output, shape index: {0}]
  %s6 = inlined_call_operand.hbm [shape: bf16[2,8,32], index: 6, kind: output, shape index: {1}]
  %7 = xla_tuple %s5, %s6
  %s8 = sld [smem:[#allocation0]]
  $region73: #{tpu_custom_call.1} parent=0
    _
  %s10 = ssub.s32 1, %s8
  %s11 = scalar_select 0, %s10, %s8
  $region1: #{tpu_custom_call.1} parent=0
    #allocation2 [shape = 'u8[8192]{0}', space=vmem, size = 0x2000, scoped, tag = 'input window, operand 0']
    #allocation3 [shape = 's32[2]{0}', space=sflag, size = 0x8, scoped, tag = 'scoped memory for tpu_custom_call.1']
    #allocation4 [shape = 's32[2]{0}', space=sflag, size = 0x8, scoped, tag = 'scoped memory for tpu_custom_call.1']
    #allocation5 [shape = 'u8[8192]{0}', space=vmem, size = 0x2000, scoped, tag = 'input window, operand 1, single buffered']
    #allocation6 [shape = 's32[1]{0}', space=sflag, size = 0x4, scoped, tag = 'scoped memory for tpu_custom_call.1']
    #allocation7 [shape = 'u8[8192]{0}', space=vmem, size = 0x2000, scoped, tag = 'input window, operand 3, single buffered']
    #allocation8 [shape = 'u8[4096]{0}', space=vmem, size = 0x1000, scoped, tag = 'output window, operand 0']
    #allocation9 [shape = 'u8[4096]{0}', space=vmem, size = 0x1000, scoped, tag = 'output window, operand 1']
    #allocation10 [shape = 's32[2]{0}', space=sflag, size = 0x8, scoped, tag = 'scoped memory for tpu_custom_call.1']
    %12 = vsyncpa [#allocation3], 0
    %s13 = scalar_lea.sflag [#allocation3], 1
    %14 = vsyncpa %s13, 0
    %15 = vsyncpa [#allocation6], 0
    %16 = vsyncpa [#allocation4], 0
    %s17 = scalar_lea.sflag [#allocation4], 1
    %18 = vsyncpa %s17, 0
    %19 = vsyncpa [#allocation10], 0
    %s20 = scalar_lea.sflag [#allocation10], 1
    %21 = vsyncpa %s20, 0
    loop: start=0, step=1, limit=4
    $region2: #{tpu_custom_call.1} parent=1 // loop_pre_header
      _
    $region3: #{tpu_custom_call.1} parent=1 // loop_header
      %s23 = sphi 0, %s27
      %p24 = scmp.ge.s32.totalorder %s23, 4
      %s30 = sphi 0, %s42
      %s31 = sphi 0, %s38
      %s32 = sphi 0, %s30
      %s33 = sphi 0, %s31
      %s34 = sphi 0, %s32
      %s35 = sphi 0, %s33
      %s47 = sphi 0, %s49
      %s50 = sphi 0, %s47
      %s51 = sphi 0, %s50
      %s67 = sphi 0, %s51
      %s71 = sphi 0, %s71
      %s73 = sphi 0, %s71
      %s74 = sphi 0, %s73
      %s88 = sphi 0, %s74
      %s92 = sphi 0, %s92
      %s94 = sphi 0, %s92
      %s95 = sphi 0, %s94
      %s109 = sphi 0, %s95
      %s113 = sphi 0, %s113
      %s115 = sphi 0, %s113
      %s116 = sphi 0, %s115
      %s130 = sphi 0, %s116
      %s134 = sphi 0, %s134
      %s136 = sphi 0, %s134
      %s137 = sphi 0, %s136
      %s151 = sphi 0, %s137
      %s159 = sphi 0, %s161
      %s162 = sphi 0, %s159
      %s163 = sphi 0, %s162
      %s179 = sphi 0, %s163
      %s187 = sphi 0, %s189
      %s190 = sphi 0, %s187
      %s191 = sphi 0, %s190
      %s207 = sphi 0, %s191
    $region4: #{tpu_custom_call.1} parent=1 // loop_header_branch
      %26 = sbr.rel (%p24) target = $region8
    $region5: #{tpu_custom_call.1} parent=1 // loop_body
      %s28 = ssub.s32 %s23, 1
      %s29 = ssub.s32 %s23, 2
      %s36 = sadd.s32 1, %s31
      %p37 = scmp.ge.s32.totalorder %s36, 1
      %s38 = scalar_select %p37, 0, %s36
      %s39 = sadd.s32 1, %s30
      %s40 = scalar_select %p37, %s39, %s30
      %p41 = scmp.ge.s32.totalorder %s40, 2
      %s42 = scalar_select %p41, 0, %s40
      %s43 = ssub.s32 %s30, %s42
      %s44 = ssub.s32 %s31, %s38
      %s45 = sor.u32 %s43, %s44
      %p46 = scmp.eq.s32.totalorder %s45, 0
      %s48 = sadd.s32 %s47, 1
      %s49 = scalar_select %p46, %s47, %s48
      %p52 = pneg %p46
      %p53 = scmp.eq.s32.totalorder %s23, 1
      %p54 = por %p52, %p53
      %p55 = scmp.ne.s32.totalorder %s47, %s50
      %p56 = scmp.eq.s32.totalorder %s23, 0
      %p57 = por %p55, %p56
      %p58 = scmp.ne.s32.totalorder %s47, %s50
      %p59 = scmp.eq.s32.totalorder %s28, 1
      %p60 = por %p58, %p59
      %p61 = scmp.ne.s32.totalorder %s50, %s51
      %p62 = scmp.eq.s32.totalorder %s28, 0
      %p63 = por %p61, %p62
      %p64 = scmp.ne.s32.totalorder %s50, %s51
      %p65 = scmp.eq.s32.totalorder %s29, 1
      %p66 = por %p64, %p65
      %p68 = scmp.ne.s32.totalorder %s51, %s67
      %p69 = scmp.eq.s32.totalorder %s29, 0
      %p70 = por %p68, %p69
      %s72 = sadd.s32 %s71, 1
      %p75 = scmp.eq.s32.totalorder %s23, 1
      %p76 = scmp.ne.s32.totalorder %s71, %s73
      %p77 = scmp.eq.s32.totalorder %s23, 0
      %p78 = por %p76, %p77
      %p79 = scmp.ne.s32.totalorder %s71, %s73
      %p80 = scmp.eq.s32.totalorder %s28, 1
      %p81 = por %p79, %p80
      %p82 = scmp.ne.s32.totalorder %s73, %s74
      %p83 = scmp.eq.s32.totalorder %s28, 0
      %p84 = por %p82, %p83
      %p85 = scmp.ne.s32.totalorder %s73, %s74
      %p86 = scmp.eq.s32.totalorder %s29, 1
      %p87 = por %p85, %p86
      %p89 = scmp.ne.s32.totalorder %s74, %s88
      %p90 = scmp.eq.s32.totalorder %s29, 0
      %p91 = por %p89, %p90
      %s93 = sadd.s32 %s92, 1
      %p96 = scmp.eq.s32.totalorder %s23, 1
      %p97 = scmp.ne.s32.totalorder %s92, %s94
      %p98 = scmp.eq.s32.totalorder %s23, 0
      %p99 = por %p97, %p98
      %p100 = scmp.ne.s32.totalorder %s92, %s94
      %p101 = scmp.eq.s32.totalorder %s28, 1
      %p102 = por %p100, %p101
      %p103 = scmp.ne.s32.totalorder %s94, %s95
      %p104 = scmp.eq.s32.totalorder %s28, 0
      %p105 = por %p103, %p104
      %p106 = scmp.ne.s32.totalorder %s94, %s95
      %p107 = scmp.eq.s32.totalorder %s29, 1
      %p108 = por %p106, %p107
      %p110 = scmp.ne.s32.totalorder %s95, %s109
      %p111 = scmp.eq.s32.totalorder %s29, 0
      %p112 = por %p110, %p111
      %s114 = sadd.s32 %s113, 1
      %p117 = scmp.eq.s32.totalorder %s23, 1
      %p118 = scmp.ne.s32.totalorder %s113, %s115
      %p119 = scmp.eq.s32.totalorder %s23, 0
      %p120 = por %p118, %p119
      %p121 = scmp.ne.s32.totalorder %s113, %s115
      %p122 = scmp.eq.s32.totalorder %s28, 1
      %p123 = por %p121, %p122
      %p124 = scmp.ne.s32.totalorder %s115, %s116
      %p125 = scmp.eq.s32.totalorder %s28, 0
      %p126 = por %p124, %p125
      %p127 = scmp.ne.s32.totalorder %s115, %s116
      %p128 = scmp.eq.s32.totalorder %s29, 1
      %p129 = por %p127, %p128
      %p131 = scmp.ne.s32.totalorder %s116, %s130
      %p132 = scmp.eq.s32.totalorder %s29, 0
      %p133 = por %p131, %p132
      %s135 = sadd.s32 %s134, 1
      %p138 = scmp.eq.s32.totalorder %s23, 1
      %p139 = scmp.ne.s32.totalorder %s134, %s136
      %p140 = scmp.eq.s32.totalorder %s23, 0
      %p141 = por %p139, %p140
      %p142 = scmp.ne.s32.totalorder %s134, %s136
      %p143 = scmp.eq.s32.totalorder %s28, 1
      %p144 = por %p142, %p143
      %p145 = scmp.ne.s32.totalorder %s136, %s137
      %p146 = scmp.eq.s32.totalorder %s28, 0
      %p147 = por %p145, %p146
      %p148 = scmp.ne.s32.totalorder %s136, %s137
      %p149 = scmp.eq.s32.totalorder %s29, 1
      %p150 = por %p148, %p149
      %p152 = scmp.ne.s32.totalorder %s137, %s151
      %p153 = scmp.eq.s32.totalorder %s29, 0
      %p154 = por %p152, %p153
      %s155 = ssub.s32 %s30, %s42
      %s156 = ssub.s32 %s31, %s38
      %s157 = sor.u32 %s155, %s156
      %p158 = scmp.eq.s32.totalorder %s157, 0
      %s160 = sadd.s32 %s159, 1
      %s161 = scalar_select %p158, %s159, %s160
      %p164 = pneg %p158
      %p165 = scmp.eq.s32.totalorder %s23, 1
      %p166 = por %p164, %p165
      %p167 = scmp.ne.s32.totalorder %s159, %s162
      %p168 = scmp.eq.s32.totalorder %s23, 0
      %p169 = por %p167, %p168
      %p170 = scmp.ne.s32.totalorder %s159, %s162
      %p171 = scmp.eq.s32.totalorder %s28, 1
      %p172 = por %p170, %p171
      %p173 = scmp.ne.s32.totalorder %s162, %s163
      %p174 = scmp.eq.s32.totalorder %s28, 0
      %p175 = por %p173, %p174
      %p176 = scmp.ne.s32.totalorder %s162, %s163
      %p177 = scmp.eq.s32.totalorder %s29, 1
      %p178 = por %p176, %p177
      %p180 = scmp.ne.s32.totalorder %s163, %s179
      %p181 = scmp.eq.s32.totalorder %s29, 0
      %p182 = por %p180, %p181
      %s183 = ssub.s32 %s30, %s42
      %s184 = ssub.s32 %s31, %s38
      %s185 = sor.u32 %s183, %s184
      %p186 = scmp.eq.s32.totalorder %s185, 0
      %s188 = sadd.s32 %s187, 1
      %s189 = scalar_select %p186, %s187, %s188
      %p192 = pneg %p186
      %p193 = scmp.eq.s32.totalorder %s23, 1
      %p194 = por %p192, %p193
      %p195 = scmp.ne.s32.totalorder %s187, %s190
      %p196 = scmp.eq.s32.totalorder %s23, 0
      %p197 = por %p195, %p196
      %p198 = scmp.ne.s32.totalorder %s187, %s190
      %p199 = scmp.eq.s32.totalorder %s28, 1
      %p200 = por %p198, %p199
      %p201 = scmp.ne.s32.totalorder %s190, %s191
      %p202 = scmp.eq.s32.totalorder %s28, 0
      %p203 = por %p201, %p202
      %p204 = scmp.ne.s32.totalorder %s190, %s191
      %p205 = scmp.eq.s32.totalorder %s29, 1
      %p206 = por %p204, %p205
      %p208 = scmp.ne.s32.totalorder %s191, %s207
      %p209 = scmp.eq.s32.totalorder %s29, 0
      %p210 = por %p208, %p209
      %p211 = scmp.le.s32.totalorder 1, %s23
      %p212 = scmp.lt.s32.totalorder %s23, 3
      %p213 = pnand %p211, %p212
      %p214 = pneg %p213
      // Predicated region
      $region9: #{tpu_custom_call.1} parent=5 // pred_check
        _
      $region10: #{tpu_custom_call.1} parent=5 // pred_check_branch
        %216 = sbr.rel (%p213) target = $region12
      $region11: #{tpu_custom_call.1} parent=5 // pred_region
        %s217 = ssub.s32 %s23, 1
        // Predicated region
        $region13: #{tpu_custom_call.1} parent=11 // pred_check
          %p218 = pneg %p84
        $region14: #{tpu_custom_call.1} parent=11 // pred_check_branch
          %220 = sbr.rel (%p218) target = $region16
        $region15: #{tpu_custom_call.1} parent=11 // pred_region
          %s222 = ssub.s32 256, 256
          %223 = vsyncadd [#allocation6], %s222
          %s224 = sshll.u32 [#allocation5], 4
          %s225 = int_to_ptr.vmem [resolvable:$true] %s224
          %230 = dma.hbm_to_vmem [thread:$0]  %s1, 256, %s225, [#allocation6], 64, 64, 4
        $region16: #{tpu_custom_call.1} parent=11 // pred_fallthru
          _
        // Predicated region
        $region17: #{tpu_custom_call.1} parent=11 // pred_check
          %p231 = pneg %p105
        $region18: #{tpu_custom_call.1} parent=11 // pred_check_branch
          %233 = sbr.rel (%p231) target = $region20
        $region19: #{tpu_custom_call.1} parent=11 // pred_region
          _
        $region20: #{tpu_custom_call.1} parent=11 // pred_fallthru
          _
        // Predicated region
        $region21: #{tpu_custom_call.1} parent=11 // pred_check
          %p234 = pneg %p126
        $region22: #{tpu_custom_call.1} parent=11 // pred_check_branch
          %236 = sbr.rel (%p234) target = $region24
        $region23: #{tpu_custom_call.1} parent=11 // pred_region
          %s238 = ssub.s32 256, 256
          %239 = vsyncadd [#allocation6], %s238
          %s240 = sshll.u32 [#allocation7], 4
          %s241 = int_to_ptr.vmem [resolvable:$true] %s240
          %246 = dma.hbm_to_vmem [thread:$0]  %s3, 256, %s241, [#allocation6], 64, 64, 4
        $region24: #{tpu_custom_call.1} parent=11 // pred_fallthru
          _
        // Predicated region
        $region25: #{tpu_custom_call.1} parent=11 // pred_check
          %p247 = pneg %p147
        $region26: #{tpu_custom_call.1} parent=11 // pred_check_branch
          %249 = sbr.rel (%p247) target = $region28
        $region27: #{tpu_custom_call.1} parent=11 // pred_region
          _
        $region28: #{tpu_custom_call.1} parent=11 // pred_fallthru
          _
      $region12: #{tpu_custom_call.1} parent=5 // pred_fallthru
        _
      %p250 = scmp.lt.s32.totalorder %s23, 2
      // Predicated region
      $region29: #{tpu_custom_call.1} parent=5 // pred_check
        %p251 = pneg %p250
      $region30: #{tpu_custom_call.1} parent=5 // pred_check_branch
        %253 = sbr.rel (%p251) target = $region32
      $region31: #{tpu_custom_call.1} parent=5 // pred_region
        // Predicated region
        $region33: #{tpu_custom_call.1} parent=31 // pred_check
          %p254 = pneg %p57
        $region34: #{tpu_custom_call.1} parent=31 // pred_check_branch
          %256 = sbr.rel (%p254) target = $region36
        $region35: #{tpu_custom_call.1} parent=31 // pred_region
          %s257 = sand.u32 %s47, 1
          %s258 = scalar_lea.sflag [#allocation3], %s257
          %s259 = sand.u32 %s47, 1
          %s260 = smul.addr %s259, 8
          %s261 = scalar_lea.vmem [#allocation2], %s260
          %s263 = ssub.s32 128, 128
          %264 = vsyncadd %s258, %s263
          %s265 = sadd.s32 %s31, %s30
          %s266 = smul.addr %s265, 128
          %s267 = scalar_lea.hbm %s0, %s266
          %s269 = sshll.u32 %s261, 4
          %s270 = int_to_ptr.vmem [resolvable:$true] %s269
          %272 = dma.hbm_to_vmem [thread:$0]  %s267, 128, %s270, %s258
        $region36: #{tpu_custom_call.1} parent=31 // pred_fallthru
          _
      $region32: #{tpu_custom_call.1} parent=5 // pred_fallthru
        _
      %p273 = scmp.le.s32.totalorder 1, %s23
      %p274 = scmp.lt.s32.totalorder %s23, 3
      %p275 = pnand %p273, %p274
      %p276 = pneg %p275
      // Predicated region
      $region37: #{tpu_custom_call.1} parent=5 // pred_check
        _
      $region38: #{tpu_custom_call.1} parent=5 // pred_check_branch
        %278 = sbr.rel (%p275) target = $region40
      $region39: #{tpu_custom_call.1} parent=5 // pred_region
        %s279 = ssub.s32 %s23, 1
        %s280 = sand.u32 %s50, 1
        %s281 = scalar_lea.sflag [#allocation3], %s280
        %s282 = sand.u32 %s50, 1
        %s283 = smul.addr %s282, 8
        %s284 = scalar_lea.vmem [#allocation2], %s283
        // Predicated region
        $region41: #{tpu_custom_call.1} parent=39 // pred_check
          %p285 = pneg %p63
        $region42: #{tpu_custom_call.1} parent=39 // pred_check_branch
          %287 = sbr.rel (%p285) target = $region44
        $region43: #{tpu_custom_call.1} parent=39 // pred_region
          %288 = dma.done %s281, 128
        $region44: #{tpu_custom_call.1} parent=39 // pred_fallthru
          _
        // Predicated region
        $region45: #{tpu_custom_call.1} parent=39 // pred_check
          %p289 = pneg %p84
        $region46: #{tpu_custom_call.1} parent=39 // pred_check_branch
          %291 = sbr.rel (%p289) target = $region48
        $region47: #{tpu_custom_call.1} parent=39 // pred_region
          %292 = dma.done [#allocation6], 256
        $region48: #{tpu_custom_call.1} parent=39 // pred_fallthru
          _
        // Predicated region
        $region49: #{tpu_custom_call.1} parent=39 // pred_check
          %p293 = pneg %p126
        $region50: #{tpu_custom_call.1} parent=39 // pred_check_branch
          %295 = sbr.rel (%p293) target = $region52
        $region51: #{tpu_custom_call.1} parent=39 // pred_region
          %296 = dma.done [#allocation6], 256
        $region52: #{tpu_custom_call.1} parent=39 // pred_fallthru
          _
        %s297 = sand.u32 %s50, 1
        %s298 = scalar_lea.sflag [#allocation3], %s297
        %s299 = sand.u32 %s50, 1
        %s300 = smul.addr %s299, 8
        %s301 = scalar_lea.vmem [#allocation2], %s300
        %p302 = pneg %p63
        %p303 = pneg %p60
        %p304 = pneg %p84
        %p305 = pneg %p81
        %p306 = pneg %p105
        %p307 = pneg %p102
        %p308 = pneg %p126
        %p309 = pneg %p123
        %p310 = pneg %p147
        %p311 = pneg %p144
        %p312 = pneg %p175
        %p313 = pneg %p172
        %s314 = sand.u32 %s162, 1
        %s315 = scalar_lea.sflag [#allocation4], %s314
        %s316 = sand.u32 %s162, 1
        %s317 = smul.addr %s316, 4
        %s318 = scalar_lea.vmem [#allocation8], %s317
        %p319 = pneg %p203
        %p320 = pneg %p200
        %s321 = sand.u32 %s190, 1
        %s322 = scalar_lea.sflag [#allocation10], %s321
        %s323 = sand.u32 %s190, 1
        %s324 = smul.addr %s323, 4
        %s325 = scalar_lea.vmem [#allocation9], %s324
        %v327 = vld [vmem:[%s284] sm:$0xff]
        %v328 = vpack.c.bf16 %v327, %v327
        %v329 = vld [vmem:[#allocation5] sm:$0xf]
        %v330 = vld [vmem:[#allocation5 + $0x4] sm:$0xf]
        %v331 = vld [vmem:[#allocation5 + $0x8] sm:$0xf]
        %v332 = vld [vmem:[#allocation5 + $0xc] sm:$0xf]
        %v333 = vld [vmem:[%s2] sm:$0x1]
        %v335 = vlaneseq
        %v336 = vshrl.u32 %v335, 7
        %v337 = vsub.s32 0, %v336
        %v338 = vrot.slane %v333, %v337
        %v344 = vunpack.c.l.b16 %v329
        %v345 = vunpack.c.l.b16 %v330
        %v346 = vunpack.c.l.b16 %v331
        %v347 = vunpack.c.l.b16 %v332
        %v348 = vpack.c.b16 %v345, %v344
        %v349 = vpack.c.b16 %v347, %v346
        %vm352 = vcmask 261120
        %v354 = vsel %vm352, %v328, 0
        %356 = vmatprep.subr.bf16.mxu0 0
        %357 = vmatpush1.bf16.msra.mxu0 %v348
        %358 = vmatprep.subr.bf16.mxu0 0
        %359 = vmatpush1.bf16.msra.mxu0 %v349
        %360 = vmatprep.subr.bf16.mxu0 0
        %361 = vmatpush1.bf16.msra.mxu0 0
        %362 = vmatprep.subr.bf16.mxu0 0
        %363 = vmatpush1.bf16.msra.mxu0 0
        %364 = vmatprep.subr.bf16.mxu0 0
        %365 = vmatpush1.bf16.msra.mxu0 0
        %366 = vmatprep.subr.bf16.mxu0 0
        %367 = vmatpush1.bf16.msra.mxu0 0
        %368 = vmatprep.subr.bf16.mxu0 0
        %369 = vmatpush1.bf16.msra.mxu0 0
        %370 = vmatprep.subr.bf16.mxu0 0
        %371 = vmatpush1.bf16.msra.mxu0 0
        %372 = vmatprep.subr.bf16.mxu0 0
        %373 = vmatpush1.bf16.msra.mxu0 0
        %374 = vmatprep.subr.bf16.mxu0 0
        %375 = vmatpush1.bf16.msra.mxu0 0
        %376 = vmatprep.subr.bf16.mxu0 0
        %377 = vmatpush1.bf16.msra.mxu0 0
        %378 = vmatprep.subr.bf16.mxu0 0
        %379 = vmatpush1.bf16.msra.mxu0 0
        %380 = vmatprep.subr.bf16.mxu0 0
        %381 = vmatpush1.bf16.msra.mxu0 0
        %382 = vmatprep.subr.bf16.mxu0 0
        %383 = vmatpush1.bf16.msra.mxu0 0
        %384 = vmatprep.subr.bf16.mxu0 0
        %385 = vmatpush1.bf16.msra.mxu0 0
        %386 = vmatprep.subr.bf16.mxu0 0
        %387 = vmatpush1.bf16.msra.mxu0 0
        %388 = vmatprep.mubr.bf16.mxu0 0
        %389 = vmatmul.mubr.bf16.gmra.mrb[0].mxu0 %v354
        %v390 = vpop.f32.mrb[0].mxu0
        %v391 = vadd.f32 %v338, %v390
        %v392 = vpop.f32.mrb[0].mxu0
        %v393 = vpop.f32.mrb[0].mxu0
        %v394 = vpop.f32.mrb[0].mxu0
        %395 = vdwg.mxu0
        %v396 = vld [vmem:[#allocation7] sm:$0xf]
        %v397 = vld [vmem:[#allocation7 + $0x4] sm:$0xf]
        %v398 = vld [vmem:[#allocation7 + $0x8] sm:$0xf]
        %v399 = vld [vmem:[#allocation7 + $0xc] sm:$0xf]
        %v400 = vld [vmem:[%s4] sm:$0x1]
        %v402 = vlaneseq
        %v403 = vshrl.u32 %v402, 7
        %v404 = vsub.s32 0, %v403
        %v405 = vrot.slane %v400, %v404
        %v411 = vunpack.c.l.b16 %v396
        %v412 = vunpack.c.l.b16 %v397
        %v413 = vunpack.c.l.b16 %v398
        %v414 = vunpack.c.l.b16 %v399
        %v415 = vpack.c.b16 %v412, %v411
        %v416 = vpack.c.b16 %v414, %v413
        %419 = vmatprep.subr.bf16.mxu0 0
        %420 = vmatpush1.bf16.msra.mxu0 %v415
        %421 = vmatprep.subr.bf16.mxu0 0
        %422 = vmatpush1.bf16.msra.mxu0 %v416
        %423 = vmatprep.subr.bf16.mxu0 0
        %424 = vmatpush1.bf16.msra.mxu0 0
        %425 = vmatprep.subr.bf16.mxu0 0
        %426 = vmatpush1.bf16.msra.mxu0 0
        %427 = vmatprep.subr.bf16.mxu0 0
        %428 = vmatpush1.bf16.msra.mxu0 0
        %429 = vmatprep.subr.bf16.mxu0 0
        %430 = vmatpush1.bf16.msra.mxu0 0
        %431 = vmatprep.subr.bf16.mxu0 0
        %432 = vmatpush1.bf16.msra.mxu0 0
        %433 = vmatprep.subr.bf16.mxu0 0
        %434 = vmatpush1.bf16.msra.mxu0 0
        %435 = vmatprep.subr.bf16.mxu0 0
        %436 = vmatpush1.bf16.msra.mxu0 0
        %437 = vmatprep.subr.bf16.mxu0 0
        %438 = vmatpush1.bf16.msra.mxu0 0
        %439 = vmatprep.subr.bf16.mxu0 0
        %440 = vmatpush1.bf16.msra.mxu0 0
        %441 = vmatprep.subr.bf16.mxu0 0
        %442 = vmatpush1.bf16.msra.mxu0 0
        %443 = vmatprep.subr.bf16.mxu0 0
        %444 = vmatpush1.bf16.msra.mxu0 0
        %445 = vmatprep.subr.bf16.mxu0 0
        %446 = vmatpush1.bf16.msra.mxu0 0
        %447 = vmatprep.subr.bf16.mxu0 0
        %448 = vmatpush1.bf16.msra.mxu0 0
        %449 = vmatprep.subr.bf16.mxu0 0
        %450 = vmatpush1.bf16.msra.mxu0 0
        %451 = vmatprep.mubr.bf16.mxu0 0
        %452 = vmatmul.mubr.bf16.gmra.mrb[0].mxu0 %v354
        %v453 = vpop.f32.mrb[0].mxu0
        %v454 = vadd.f32 %v405, %v453
        %v455 = vpop.f32.mrb[0].mxu0
        %v456 = vpop.f32.mrb[0].mxu0
        %v457 = vpop.f32.mrb[0].mxu0
        %458 = vdwg.mxu0
        %v459 = vpack.c.bf16 %v391, %v391
        %vm460 = vcmask 257024
        %461 = vst.msk [vmem:[%s318] sm:$0xf] %vm460, %v459
        %v462 = vpack.c.bf16 %v454, %v454
        %463 = vst.msk [vmem:[%s325] sm:$0xf] %vm460, %v462
        %s464 = sand.u32 %s162, 1
        %s465 = scalar_lea.sflag [#allocation4], %s464
        %s466 = sand.u32 %s162, 1
        %s467 = smul.addr %s466, 4
        %s468 = scalar_lea.vmem [#allocation8], %s467
        %s469 = sand.u32 %s190, 1
        %s470 = scalar_lea.sflag [#allocation10], %s469
        %s471 = sand.u32 %s190, 1
        %s472 = smul.addr %s471, 4
        %s473 = scalar_lea.vmem [#allocation9], %s472
        // Predicated region
        $region53: #{tpu_custom_call.1} parent=39 // pred_check
          %p474 = pneg %p172
        $region54: #{tpu_custom_call.1} parent=39 // pred_check_branch
          %476 = sbr.rel (%p474) target = $region56
        $region55: #{tpu_custom_call.1} parent=39 // pred_region
          %s478 = ssub.s32 64, 64
          %479 = vsyncadd %s465, %s478
          %s480 = sadd.s32 %s33, %s32
          %s481 = smul.addr %s480, 64
          %s482 = scalar_lea.hbm %s5, %s481
          %s484 = sshll.u32 %s468, 4
          %s485 = int_to_ptr.vmem [resolvable:$true] %s484
          %487 = dma.vmem_to_hbm [thread:$0]  %s485, 64, %s482, %s465
        $region56: #{tpu_custom_call.1} parent=39 // pred_fallthru
          _
        // Predicated region
        $region57: #{tpu_custom_call.1} parent=39 // pred_check
          %p488 = pneg %p200
        $region58: #{tpu_custom_call.1} parent=39 // pred_check_branch
          %490 = sbr.rel (%p488) target = $region60
        $region59: #{tpu_custom_call.1} parent=39 // pred_region
          %s492 = ssub.s32 64, 64
          %493 = vsyncadd %s470, %s492
          %s494 = sadd.s32 %s33, %s32
          %s495 = smul.addr %s494, 64
          %s496 = scalar_lea.hbm %s6, %s495
          %s498 = sshll.u32 %s473, 4
          %s499 = int_to_ptr.vmem [resolvable:$true] %s498
          %501 = dma.vmem_to_hbm [thread:$0]  %s499, 64, %s496, %s470
        $region60: #{tpu_custom_call.1} parent=39 // pred_fallthru
          _
      $region40: #{tpu_custom_call.1} parent=5 // pred_fallthru
        _
      %p502 = scmp.le.s32.totalorder 2, %s23
      // Predicated region
      $region61: #{tpu_custom_call.1} parent=5 // pred_check
        %p503 = pneg %p502
      $region62: #{tpu_custom_call.1} parent=5 // pred_check_branch
        %505 = sbr.rel (%p503) target = $region64
      $region63: #{tpu_custom_call.1} parent=5 // pred_region
        %s506 = ssub.s32 %s23, 2
        // Predicated region
        $region65: #{tpu_custom_call.1} parent=63 // pred_check
          %p507 = pneg %p178
        $region66: #{tpu_custom_call.1} parent=63 // pred_check_branch
          %509 = sbr.rel (%p507) target = $region68
        $region67: #{tpu_custom_call.1} parent=63 // pred_region
          %s510 = sand.u32 %s163, 1
          %s511 = scalar_lea.sflag [#allocation4], %s510
          %s512 = sand.u32 %s163, 1
          %s513 = smul.addr %s512, 4
          %s514 = scalar_lea.vmem [#allocation8], %s513
          %515 = dma.done %s511, 64
        $region68: #{tpu_custom_call.1} parent=63 // pred_fallthru
          _
        // Predicated region
        $region69: #{tpu_custom_call.1} parent=63 // pred_check
          %p516 = pneg %p206
        $region70: #{tpu_custom_call.1} parent=63 // pred_check_branch
          %518 = sbr.rel (%p516) target = $region72
        $region71: #{tpu_custom_call.1} parent=63 // pred_region
          %s519 = sand.u32 %s191, 1
          %s520 = scalar_lea.sflag [#allocation10], %s519
          %s521 = sand.u32 %s191, 1
          %s522 = smul.addr %s521, 4
          %s523 = scalar_lea.vmem [#allocation9], %s522
          %524 = dma.done %s520, 64
        $region72: #{tpu_custom_call.1} parent=63 // pred_fallthru
          _
      $region64: #{tpu_custom_call.1} parent=5 // pred_fallthru
        _
    $region6: #{tpu_custom_call.1} parent=1 // loop_footer
      %s27 = sadd.s32 1, %s23
    $region7: #{tpu_custom_call.1} parent=1 // loop_footer_branch
      %22 = sbr.rel target = $region3
    $region8: #{tpu_custom_call.1} parent=1 // loop_exit
      _
    %525 = vsyncpa [#allocation3], 1
    %s526 = scalar_lea.sflag [#allocation3], 1
    %527 = vsyncpa %s526, 1
    %528 = vsyncpa [#allocation6], 1
    %529 = vsyncpa [#allocation4], 1
    %s530 = scalar_lea.sflag [#allocation4], 1
    %531 = vsyncpa %s530, 1
    %532 = vsyncpa [#allocation10], 1
    %s533 = scalar_lea.sflag [#allocation10], 1
    %534 = vsyncpa %s533, 1

</llo_original>
